<compile_context>
chip_gen: v7x
topology: tpu7x:2x2x1
jax: 0.10.0
libtpu: 0.0.40
codegen_flags: <defaults>
</compile_context>

<pallas_src>
import functools

import jax
import jax.numpy as jnp
from jax.experimental import pallas as pl
from jax.experimental.pallas import tpu as pltpu

EPS = 1e-5
LANE = 128
NEG = -1e30


def _round_up(n, m):
    return ((n + m - 1) // m) * m


def _fused_kernel(x_ref, cp_ref, dp_ref, fp_ref, out_ref, slab_ref, *,
                  k_max, num_dense, Bp, S, C, nbnf, D):
    m = Bp * S
    KC = k_max * C

    # ---- merged im2col slab: (Bp*S, k_max*C), one shifted store per dk ----
    x = x_ref[...]                                   # (Bp*S + 8, C), zero-padded tail
    for dk in range(k_max):
        slab_ref[:, dk * C:(dk + 1) * C] = x[dk:dk + m, :]

    # ---- ONE MXU matmul covering every branch (zero-padded K blocks) ----
    conv = jnp.dot(slab_ref[...], cp_ref[0:KC, :],
                   preferred_element_type=jnp.float32)          # (Bp*S, nb*nf)

    # ---- vectorized max-pool: additive -inf mask + single axis-1 reduce ----
    # mask kills positions >= S-k per branch (and any cross-batch / padded rows).
    conv = conv.reshape(Bp, S, nbnf) + cp_ref[KC:KC + S, :][None, :, :]
    pooled = jnp.max(conv, axis=1)                              # (Bp, nb*nf)
    # branch BN + conv bias are folded into the concat layer weights host-side.

    # ---- dense stack (BN pre-folded host-side) ----
    rc = _round_up(nbnf + 1, 8)
    rd = _round_up(D + 1, 8)
    h = jnp.maximum(
        jnp.dot(pooled, dp_ref[0:nbnf, :], preferred_element_type=jnp.float32)
        + dp_ref[nbnf:nbnf + 1, :], 0.0)
    off = rc
    for _ in range(num_dense):
        h = jnp.maximum(
            jnp.dot(h, dp_ref[off:off + D, :], preferred_element_type=jnp.float32)
            + dp_ref[off + D:off + D + 1, :], 0.0)
        off += rd

    logits = (jnp.dot(h, fp_ref[0:D, :], preferred_element_type=jnp.float32)
              + fp_ref[D:D + 1, :])
    out_ref[...] = jax.nn.sigmoid(logits)                       # full (Bp, 128) tile


def deep_ec_cnn_forward(x, kp, *, kernel_sizes, num_dense_layers, num_classes):
    B, S, C = x.shape
    k_max = max(kernel_sizes)
    assert S > k_max, "input_size must exceed max kernel size"
    Bp = _round_up(max(B, 8), 8)                     # pad batch -> unmasked out store
    nbnf = kp["conv_pack"].shape[1]
    D = kp["dense_pack"].shape[1]
    npad = kp["final_pack"].shape[1]
    m = Bp * S

    # flatten + pad: zero rows for padded batches and for the k_max shifted slices.
    x_pad = jnp.pad(x.reshape(B * S, C), ((0, m - B * S + 8), (0, 0)))

    flops = 2 * (m * k_max * C * nbnf + Bp * nbnf * D
                 + num_dense_layers * Bp * D * D + Bp * D * npad)
    bytes_accessed = 4 * (x_pad.size + kp["conv_pack"].size + kp["dense_pack"].size
                          + kp["final_pack"].size + Bp * npad)

    vmem = pl.BlockSpec(memory_space=pltpu.MemorySpace.VMEM)
    out = pl.pallas_call(
        functools.partial(_fused_kernel, k_max=k_max, num_dense=num_dense_layers,
                          Bp=Bp, S=S, C=C, nbnf=nbnf, D=D),
        out_shape=jax.ShapeDtypeStruct((Bp, npad), jnp.float32),
        in_specs=[vmem] * 4,
        out_specs=vmem,
        scratch_shapes=[pltpu.VMEM((m, k_max * C), jnp.float32)],
        cost_estimate=pl.CostEstimate(flops=flops, transcendentals=Bp * npad,
                                      bytes_accessed=bytes_accessed),
    )(x_pad, kp["conv_pack"], kp["dense_pack"], kp["final_pack"])
    return out[:B, :num_classes]


# ----------------- deterministic parameter construction -----------------
def init_params(key, num_filters, input_size, num_columns, kernel_sizes,
                num_dense_layers, dense_layer_size, num_classes):
    params = {}
    keys = iter(jax.random.split(key, 128))

    def linear_init(fan_in, fan_out):
        kw, kb = jax.random.split(next(keys))
        scale = 1.0 / jnp.sqrt(fan_in)
        w = jax.random.uniform(kw, (fan_in, fan_out), jnp.float32, -scale, scale)
        b = jax.random.uniform(kb, (1, fan_out), jnp.float32, -scale, scale)
        return w, b

    def bn_init(n):
        k1, k2, k3, k4 = jax.random.split(next(keys), 4)
        gamma = 1.0 + 0.1 * jax.random.normal(k1, (1, n), jnp.float32)
        beta = 0.1 * jax.random.normal(k2, (1, n), jnp.float32)
        mean = 0.1 * jax.random.normal(k3, (1, n), jnp.float32)
        var = jax.random.uniform(k4, (1, n), jnp.float32, 0.5, 1.5)
        return jnp.concatenate([gamma, beta, mean, var], axis=0)  # (4, n)

    for i, ks in enumerate(kernel_sizes):
        kw, kb = jax.random.split(next(keys))
        fan_in = ks * num_columns
        scale = 1.0 / jnp.sqrt(fan_in)
        params[f"conv_w{i}"] = jax.random.uniform(
            kw, (ks, num_columns, num_filters), jnp.float32, -scale, scale)
        params[f"conv_b{i}"] = jax.random.uniform(
            kb, (1, num_filters), jnp.float32, -scale, scale)
        params[f"conv_bn{i}"] = bn_init(num_filters)

    w, b = linear_init(num_filters * len(kernel_sizes), dense_layer_size)
    params["concat_w"], params["concat_b"] = w, b
    params["concat_bn"] = bn_init(dense_layer_size)
    for i in range(num_dense_layers):
        w, b = linear_init(dense_layer_size, dense_layer_size)
        params[f"dense_w{i}"], params[f"dense_b{i}"] = w, b
        params[f"dense_bn{i}"] = bn_init(dense_layer_size)
    w, b = linear_init(dense_layer_size, num_classes)
    params["final_w"], params["final_b"] = w, b
    return params


# ---------- host-side BN folding + operand packing for the fused kernel ----------
def pack_params(params, *, kernel_sizes, num_dense_layers, num_columns,
                input_size, num_filters, dense_layer_size, num_classes):
    C, S, nf, D = num_columns, input_size, num_filters, dense_layer_size
    nb = len(kernel_sizes)
    k_max = max(kernel_sizes)
    KC, nbnf = k_max * C, nb * nf

    # conv_pack = [ combined conv weight (KC, nb*nf) ; additive pool mask (S, nb*nf) ]
    w_comb = jnp.zeros((KC, nbnf), jnp.float32)
    mask = jnp.zeros((S, nbnf), jnp.float32)
    scales, shifts = [], []
    for i, k in enumerate(kernel_sizes):
        w = params[f"conv_w{i}"].reshape(k * C, nf)          # (k*C, nf)
        w_comb = w_comb.at[:k * C, i * nf:(i + 1) * nf].set(w)
        # MaxPool2d((S-k,1)): max over the FIRST S-k conv positions (last one dropped).
        col = jnp.where(jnp.arange(S) < (S - k), 0.0, NEG).astype(jnp.float32)
        mask = mask.at[:, i * nf:(i + 1) * nf].set(
            jnp.broadcast_to(col[:, None], (S, nf)))
        bias = params[f"conv_b{i}"][0]
        gamma, beta, mean, var = params[f"conv_bn{i}"]
        scale = gamma * jax.lax.rsqrt(var + EPS)
        scales.append(scale)
        shifts.append(beta - mean * scale + bias * scale)    # conv bias folded post-pool
    conv_pack = jnp.concatenate([w_comb, mask], axis=0)      # (KC+S, nb*nf)
    scale_all = jnp.concatenate(scales)                      # (nb*nf,)
    shift_all = jnp.concatenate(shifts)                      # (nb*nf,)

    def fold_linear(w, b, bn):
        gamma, beta, mean, var = bn
        s = gamma * jax.lax.rsqrt(var + EPS)
        return w * s[None, :], (b[0] - mean) * s + beta

    def pad_rows(a, rows):
        return jnp.pad(a, ((0, rows - a.shape[0]), (0, 0)))

    # concat layer: fold its BN, then fold the per-feature post-pool (scale, shift)
    # (branch BatchNorms + conv biases) into its weight/bias.
    wc, bc = fold_linear(params["concat_w"], params["concat_b"], params["concat_bn"])
    bc = bc + shift_all @ wc
    wc = scale_all[:, None] * wc

    blocks = [pad_rows(jnp.concatenate([wc, bc[None, :]], axis=0),
                       _round_up(nbnf + 1, 8))]
    for j in range(num_dense_layers):
        w, b = fold_linear(params[f"dense_w{j}"], params[f"dense_b{j}"],
                           params[f"dense_bn{j}"])
        blocks.append(pad_rows(jnp.concatenate([w, b[None, :]], axis=0),
                               _round_up(D + 1, 8)))
    dense_pack = jnp.concatenate(blocks, axis=0)             # (56 + nd*40, D)

    npad = _round_up(num_classes, LANE)                      # lane-dense output store
    wf = jnp.pad(params["final_w"], ((0, 0), (0, npad - num_classes)))
    bf = jnp.pad(params["final_b"][0], (0, npad - num_classes))
    final_pack = pad_rows(jnp.concatenate([wf, bf[None, :]], axis=0),
                          _round_up(D + 1, 8))
    return {"conv_pack": conv_pack, "dense_pack": dense_pack,
            "final_pack": final_pack}


# ----------------- pure-JAX reference (unfolded params) -----------------
def _bn_ref(x, bn):
    return bn[0] * (x - bn[2]) * jax.lax.rsqrt(bn[3] + EPS) + bn[1]


def reference_forward(x, params, *, kernel_sizes, num_dense_layers):
    B, S, C = x.shape
    feats = []
    for i, k in enumerate(kernel_sizes):
        w, bias, bn = (params[f"conv_w{i}"], params[f"conv_b{i}"],
                       params[f"conv_bn{i}"])
        pool = S - k
        conv = jnp.zeros((B, pool, w.shape[-1]), jnp.float32)
        for dk in range(k):
            conv = conv + jnp.einsum("bpc,cf->bpf", x[:, dk:dk + pool, :], w[dk])
        conv = conv + bias[0]
        feats.append(_bn_ref(jnp.max(conv, axis=1), bn))
    h = jnp.concatenate(feats, axis=1)
    h = h @ params["concat_w"] + params["concat_b"][0]
    h = jnp.maximum(_bn_ref(h, params["concat_bn"]), 0.0)
    for i in range(num_dense_layers):
        h = h @ params[f"dense_w{i}"] + params[f"dense_b{i}"][0]
        h = jnp.maximum(_bn_ref(h, params[f"dense_bn{i}"]), 0.0)
    logits = h @ params["final_w"] + params["final_b"][0]
    return jax.nn.sigmoid(logits)


if __name__ == "__main__":
    # Small shapes consistent with the module's forward.
    num_filters = 16
    input_size = 16        # S (sequence length / image height)
    num_columns = 8        # C (one-hot width / image width)
    kernel_sizes = (2, 3, 4)
    num_dense_layers = 2
    dense_layer_size = 32
    num_classes = 10
    batch = 4

    key = jax.random.PRNGKey(0)
    kx, kp = jax.random.split(key)
    x = jax.random.normal(kx, (batch, input_size, num_columns), jnp.float32)
    params = init_params(kp, num_filters, input_size, num_columns, kernel_sizes,
                         num_dense_layers, dense_layer_size, num_classes)
    kparams = pack_params(params, kernel_sizes=kernel_sizes,
                          num_dense_layers=num_dense_layers,
                          num_columns=num_columns, input_size=input_size,
                          num_filters=num_filters,
                          dense_layer_size=dense_layer_size,
                          num_classes=num_classes)

    fwd = jax.jit(functools.partial(
        deep_ec_cnn_forward, kernel_sizes=kernel_sizes,
        num_dense_layers=num_dense_layers, num_classes=num_classes))
    out = jax.block_until_ready(fwd(x, kparams))

    ref = reference_forward(x, params, kernel_sizes=kernel_sizes,
                            num_dense_layers=num_dense_layers)
    assert out.shape == (batch, num_classes), out.shape
    max_err = float(jnp.max(jnp.abs(out - ref)))
    if not bool(jnp.allclose(out, ref, atol=2e-2, rtol=2e-2)):
        raise AssertionError(
            f"Pallas output mismatch vs reference, max_err={max_err}")
    print("KERNEL_OK")
</pallas_src>

<mosaic_0001>
module attributes {stable_mosaic.version = 11 : i64} {
  func.func @_fused_kernel(%arg0: memref<136x8xf32, #tpu.memory_space<vmem>>, %arg1: memref<48x48xf32, #tpu.memory_space<vmem>>, %arg2: memref<136x32xf32, #tpu.memory_space<vmem>>, %arg3: memref<40x128xf32, #tpu.memory_space<vmem>>, %arg4: memref<8x128xf32, #tpu.memory_space<vmem>>, %arg5: memref<128x32xf32, #tpu.memory_space<vmem>>) attributes {dimension_semantics = [], scalar_prefetch = 0 : i64, scratch_operands = 1 : i64, tpu.core_type = #tpu.core_type<tc>} {
    %c0 = arith.constant 0 : index
    %c0_0 = arith.constant 0 : index
    %0 = vector.load %arg0[%c0, %c0_0] : memref<136x8xf32, #tpu.memory_space<vmem>>, vector<136x8xf32>
    %1 = vector.extract_strided_slice %0 {offsets = [0, 0], sizes = [128, 8], strides = [1, 1]} : vector<136x8xf32> to vector<128x8xf32>
    %c0_1 = arith.constant 0 : index
    %c0_2 = arith.constant 0 : index
    %2 = vector.load %arg5[%c0_1, %c0_2] : memref<128x32xf32, #tpu.memory_space<vmem>>, vector<128x8xf32>
    tpu.vector_store %arg5[%c0_1, %c0_2], %1 {strides = array<i32>} : memref<128x32xf32, #tpu.memory_space<vmem>>, vector<128x8xf32>,
    %3 = vector.extract_strided_slice %0 {offsets = [1, 0], sizes = [128, 8], strides = [1, 1]} : vector<136x8xf32> to vector<128x8xf32>
    %c0_3 = arith.constant 0 : index
    %c8 = arith.constant 8 : index
    %4 = vector.load %arg5[%c0_3, %c8] : memref<128x32xf32, #tpu.memory_space<vmem>>, vector<128x8xf32>
    tpu.vector_store %arg5[%c0_3, %c8], %3 {strides = array<i32>} : memref<128x32xf32, #tpu.memory_space<vmem>>, vector<128x8xf32>,
    %5 = vector.extract_strided_slice %0 {offsets = [2, 0], sizes = [128, 8], strides = [1, 1]} : vector<136x8xf32> to vector<128x8xf32>
    %c0_4 = arith.constant 0 : index
    %c16 = arith.constant 16 : index
    %6 = vector.load %arg5[%c0_4, %c16] : memref<128x32xf32, #tpu.memory_space<vmem>>, vector<128x8xf32>
    tpu.vector_store %arg5[%c0_4, %c16], %5 {strides = array<i32>} : memref<128x32xf32, #tpu.memory_space<vmem>>, vector<128x8xf32>,
    %7 = vector.extract_strided_slice %0 {offsets = [3, 0], sizes = [128, 8], strides = [1, 1]} : vector<136x8xf32> to vector<128x8xf32>
    %c0_5 = arith.constant 0 : index
    %c24 = arith.constant 24 : index
    %8 = vector.load %arg5[%c0_5, %c24] : memref<128x32xf32, #tpu.memory_space<vmem>>, vector<128x8xf32>
    tpu.vector_store %arg5[%c0_5, %c24], %7 {strides = array<i32>} : memref<128x32xf32, #tpu.memory_space<vmem>>, vector<128x8xf32>,
    %c0_6 = arith.constant 0 : index
    %c0_7 = arith.constant 0 : index
    %9 = vector.load %arg5[%c0_6, %c0_7] : memref<128x32xf32, #tpu.memory_space<vmem>>, vector<128x32xf32>
    %c0_8 = arith.constant 0 : index
    %c0_9 = arith.constant 0 : index
    %10 = vector.load %arg1[%c0_8, %c0_9] : memref<48x48xf32, #tpu.memory_space<vmem>>, vector<32x48xf32>
    %cst = arith.constant dense<0.000000e+00> : vector<128x48xf32>
    %11 = tpu.matmul %9, %10, %cst {dimension_numbers = #tpu.dot_dimension_numbers<[1], [0], [0], [1], [0, 0, 1, 1], [], []>} : vector<128x32xf32>, vector<32x48xf32>, vector<128x48xf32> -> vector<128x48xf32>
    %12 = vector.shape_cast %11 : vector<128x48xf32> to vector<8x16x48xf32>
    %c32 = arith.constant 32 : index
    %c0_10 = arith.constant 0 : index
    %13 = vector.load %arg1[%c32, %c0_10] : memref<48x48xf32, #tpu.memory_space<vmem>>, vector<16x48xf32>
    %14 = vector.shape_cast %13 : vector<16x48xf32> to vector<1x16x48xf32>
    %15 = vector.broadcast %14 : vector<1x16x48xf32> to vector<8x16x48xf32>
    %16 = arith.addf %12, %15 : vector<8x16x48xf32>
    %cst_11 = arith.constant dense<0xFF800000> : vector<8x48xf32>
    %17 = vector.multi_reduction <maximumf>, %16, %cst_11 [1] : vector<8x16x48xf32> to vector<8x48xf32>
    %c0_12 = arith.constant 0 : index
    %c0_13 = arith.constant 0 : index
    %18 = vector.load %arg2[%c0_12, %c0_13] : memref<136x32xf32, #tpu.memory_space<vmem>>, vector<48x32xf32>
    %cst_14 = arith.constant dense<0.000000e+00> : vector<8x32xf32>
    %19 = tpu.matmul %17, %18, %cst_14 {dimension_numbers = #tpu.dot_dimension_numbers<[1], [0], [0], [1], [0, 0, 1, 1], [], []>} : vector<8x48xf32>, vector<48x32xf32>, vector<8x32xf32> -> vector<8x32xf32>
    %c48 = arith.constant 48 : index
    %c0_15 = arith.constant 0 : index
    %20 = vector.load %arg2[%c48, %c0_15] : memref<136x32xf32, #tpu.memory_space<vmem>>, vector<1x32xf32>
    %21 = vector.broadcast %20 : vector<1x32xf32> to vector<8x32xf32>
    %22 = arith.addf %19, %21 : vector<8x32xf32>
    %cst_16 = arith.constant 0.000000e+00 : f32
    %23 = vector.broadcast %cst_16 : f32 to vector<8x32xf32>
    %24 = arith.maximumf %22, %23 : vector<8x32xf32>
    %c56 = arith.constant 56 : index
    %c0_17 = arith.constant 0 : index
    %25 = vector.load %arg2[%c56, %c0_17] : memref<136x32xf32, #tpu.memory_space<vmem>>, vector<32x32xf32>
    %cst_18 = arith.constant dense<0.000000e+00> : vector<8x32xf32>
    %26 = tpu.matmul %24, %25, %cst_18 {dimension_numbers = #tpu.dot_dimension_numbers<[1], [0], [0], [1], [0, 0, 1, 1], [], []>} : vector<8x32xf32>, vector<32x32xf32>, vector<8x32xf32> -> vector<8x32xf32>
    %c88 = arith.constant 88 : index
    %c0_19 = arith.constant 0 : index
    %27 = vector.load %arg2[%c88, %c0_19] : memref<136x32xf32, #tpu.memory_space<vmem>>, vector<1x32xf32>
    %28 = vector.broadcast %27 : vector<1x32xf32> to vector<8x32xf32>
    %29 = arith.addf %26, %28 : vector<8x32xf32>
    %cst_20 = arith.constant 0.000000e+00 : f32
    %30 = vector.broadcast %cst_20 : f32 to vector<8x32xf32>
    %31 = arith.maximumf %29, %30 : vector<8x32xf32>
    %c96 = arith.constant 96 : index
    %c0_21 = arith.constant 0 : index
    %32 = vector.load %arg2[%c96, %c0_21] : memref<136x32xf32, #tpu.memory_space<vmem>>, vector<32x32xf32>
    %cst_22 = arith.constant dense<0.000000e+00> : vector<8x32xf32>
    %33 = tpu.matmul %31, %32, %cst_22 {dimension_numbers = #tpu.dot_dimension_numbers<[1], [0], [0], [1], [0, 0, 1, 1], [], []>} : vector<8x32xf32>, vector<32x32xf32>, vector<8x32xf32> -> vector<8x32xf32>
    %c128 = arith.constant 128 : index
    %c0_23 = arith.constant 0 : index
    %34 = vector.load %arg2[%c128, %c0_23] : memref<136x32xf32, #tpu.memory_space<vmem>>, vector<1x32xf32>
    %35 = vector.broadcast %34 : vector<1x32xf32> to vector<8x32xf32>
    %36 = arith.addf %33, %35 : vector<8x32xf32>
    %cst_24 = arith.constant 0.000000e+00 : f32
    %37 = vector.broadcast %cst_24 : f32 to vector<8x32xf32>
    %38 = arith.maximumf %36, %37 : vector<8x32xf32>
    %c0_25 = arith.constant 0 : index
    %c0_26 = arith.constant 0 : index
    %39 = vector.load %arg3[%c0_25, %c0_26] : memref<40x128xf32, #tpu.memory_space<vmem>>, vector<32x128xf32>
    %cst_27 = arith.constant dense<0.000000e+00> : vector<8x128xf32>
    %40 = tpu.matmul %38, %39, %cst_27 {dimension_numbers = #tpu.dot_dimension_numbers<[1], [0], [0], [1], [0, 0, 1, 1], [], []>} : vector<8x32xf32>, vector<32x128xf32>, vector<8x128xf32> -> vector<8x128xf32>
    %c32_28 = arith.constant 32 : index
    %c0_29 = arith.constant 0 : index
    %41 = vector.load %arg3[%c32_28, %c0_29] : memref<40x128xf32, #tpu.memory_space<vmem>>, vector<1x128xf32>
    %42 = vector.broadcast %41 : vector<1x128xf32> to vector<8x128xf32>
    %43 = arith.addf %40, %42 : vector<8x128xf32>
    %44 = arith.negf %43 : vector<8x128xf32>
    %45 = math.exp %44 : vector<8x128xf32>
    %cst_30 = arith.constant 1.000000e+00 : f32
    %46 = vector.broadcast %cst_30 : f32 to vector<8x128xf32>
    %47 = arith.addf %46, %45 : vector<8x128xf32>
    %48 = arith.divf %46, %47 : vector<8x128xf32>
    %c0_31 = arith.constant 0 : index
    %c0_32 = arith.constant 0 : index
    %49 = vector.load %arg4[%c0_31, %c0_32] : memref<8x128xf32, #tpu.memory_space<vmem>>, vector<8x128xf32>
    tpu.vector_store %arg4[%c0_31, %c0_32], %48 {strides = array<i32>} : memref<8x128xf32, #tpu.memory_space<vmem>>, vector<8x128xf32>,
    return
  }
}

</mosaic_0001>

<llo_original>
// kernel: deep_ec_cnn_forward.1
$region0: #{deep_ec_cnn_forward.1}
  #allocation0 [shape = 'u32[]', space=smem, size = 0x4, offset = 0x4, fixed_abs, tag = 'smem constant byte address 0x4 - core index']
  #allocation1 [shape = 'u32[144,128]{1,0:T(1,128)}', space=vmem, size = 0x12000, scoped, tag = 'internal scratch']
  #allocation2 [shape = 'f32[128,32]{1,0:T(8,128)}', space=vmem, size = 0x10000, scoped, tag = 'scratch operand']
  %s0 = inlined_call_operand.vmem [shape: f32[136,8], index: 0, kind: input, shape index: {}]
  %s1 = inlined_call_operand.vmem [shape: f32[48,48], index: 1, kind: input, shape index: {}]
  %s2 = inlined_call_operand.vmem [shape: f32[136,32], index: 2, kind: input, shape index: {}]
  %s3 = inlined_call_operand.vmem [shape: f32[40,128], index: 3, kind: input, shape index: {}]
  %s4 = inlined_call_operand.vmem [shape: f32[8,128], index: 4, kind: output, shape index: {}]
  %s5 = sld [smem:[#allocation0]]
  $region26: #{deep_ec_cnn_forward.1} parent=0
    _
  %s7 = ssub.s32 1, %s5
  %s8 = scalar_select 0, %s7, %s5
  // Predicated region
  $region2: #{deep_ec_cnn_forward.1} parent=0 // pred_check
    _
  $region3: #{deep_ec_cnn_forward.1} parent=0 // pred_check_branch
    %10 = sbr.rel (0) target = $region5
  $region4: #{deep_ec_cnn_forward.1} parent=0 // pred_region
    _
  $region5: #{deep_ec_cnn_forward.1} parent=0 // pred_fallthru
    _
  // Predicated region
  $region6: #{deep_ec_cnn_forward.1} parent=0 // pred_check
    _
  $region7: #{deep_ec_cnn_forward.1} parent=0 // pred_check_branch
    %12 = sbr.rel (0) target = $region9
  $region8: #{deep_ec_cnn_forward.1} parent=0 // pred_region
    _
  $region9: #{deep_ec_cnn_forward.1} parent=0 // pred_fallthru
    _
  // Predicated region
  $region10: #{deep_ec_cnn_forward.1} parent=0 // pred_check
    _
  $region11: #{deep_ec_cnn_forward.1} parent=0 // pred_check_branch
    %14 = sbr.rel (0) target = $region13
  $region12: #{deep_ec_cnn_forward.1} parent=0 // pred_region
    _
  $region13: #{deep_ec_cnn_forward.1} parent=0 // pred_fallthru
    _
  // Predicated region
  $region14: #{deep_ec_cnn_forward.1} parent=0 // pred_check
    _
  $region15: #{deep_ec_cnn_forward.1} parent=0 // pred_check_branch
    %16 = sbr.rel (0) target = $region17
  $region16: #{deep_ec_cnn_forward.1} parent=0 // pred_region
    _
  $region17: #{deep_ec_cnn_forward.1} parent=0 // pred_fallthru
    _
  %v17 = vld [vmem:[%s0] sm:$0xff]
  %v18 = vld [vmem:[%s0 + $0x8] sm:$0xff]
  %v19 = vld [vmem:[%s0 + $0x10] sm:$0xff]
  %v20 = vld [vmem:[%s0 + $0x18] sm:$0xff]
  %v21 = vld [vmem:[%s0 + $0x20] sm:$0xff]
  %v22 = vld [vmem:[%s0 + $0x28] sm:$0xff]
  %v23 = vld [vmem:[%s0 + $0x30] sm:$0xff]
  %v24 = vld [vmem:[%s0 + $0x38] sm:$0xff]
  %v25 = vld [vmem:[%s0 + $0x40] sm:$0xff]
  %v26 = vld [vmem:[%s0 + $0x48] sm:$0xff]
  %v27 = vld [vmem:[%s0 + $0x50] sm:$0xff]
  %v28 = vld [vmem:[%s0 + $0x58] sm:$0xff]
  %v29 = vld [vmem:[%s0 + $0x60] sm:$0xff]
  %v30 = vld [vmem:[%s0 + $0x68] sm:$0xff]
  %v31 = vld [vmem:[%s0 + $0x70] sm:$0xff]
  %v32 = vld [vmem:[%s0 + $0x78] sm:$0xff]
  %v33 = vld [vmem:[%s0 + $0x80] sm:$0xff]
  %vm34 = vcmask 64512
  %35 = vst.msk [vmem:[#allocation2] sm:$0xff] %vm34, %v17
  %36 = vst.msk [vmem:[#allocation2 + $0x8] sm:$0xff] %vm34, %v18
  %37 = vst.msk [vmem:[#allocation2 + $0x10] sm:$0xff] %vm34, %v19
  %38 = vst.msk [vmem:[#allocation2 + $0x18] sm:$0xff] %vm34, %v20
  %39 = vst.msk [vmem:[#allocation2 + $0x20] sm:$0xff] %vm34, %v21
  %40 = vst.msk [vmem:[#allocation2 + $0x28] sm:$0xff] %vm34, %v22
  %41 = vst.msk [vmem:[#allocation2 + $0x30] sm:$0xff] %vm34, %v23
  %42 = vst.msk [vmem:[#allocation2 + $0x38] sm:$0xff] %vm34, %v24
  %43 = vst.msk [vmem:[#allocation2 + $0x40] sm:$0xff] %vm34, %v25
  %44 = vst.msk [vmem:[#allocation2 + $0x48] sm:$0xff] %vm34, %v26
  %45 = vst.msk [vmem:[#allocation2 + $0x50] sm:$0xff] %vm34, %v27
  %46 = vst.msk [vmem:[#allocation2 + $0x58] sm:$0xff] %vm34, %v28
  %47 = vst.msk [vmem:[#allocation2 + $0x60] sm:$0xff] %vm34, %v29
  %48 = vst.msk [vmem:[#allocation2 + $0x68] sm:$0xff] %vm34, %v30
  %49 = vst.msk [vmem:[#allocation2 + $0x70] sm:$0xff] %vm34, %v31
  %50 = vst.msk [vmem:[#allocation2 + $0x78] sm:$0xff] %vm34, %v32
  %68 = vrot.lane.b32.xlu0 %v17, 8
  %v69 = vpop.permute.xlu0 %68
  %70 = vrot.lane.b32.xlu0 %v18, 8
  %v71 = vpop.permute.xlu0 %70
  %72 = vrot.lane.b32.xlu0 %v19, 8
  %v73 = vpop.permute.xlu0 %72
  %74 = vrot.lane.b32.xlu0 %v20, 8
  %v75 = vpop.permute.xlu0 %74
  %76 = vrot.lane.b32.xlu0 %v21, 8
  %v77 = vpop.permute.xlu0 %76
  %78 = vrot.lane.b32.xlu0 %v22, 8
  %v79 = vpop.permute.xlu0 %78
  %80 = vrot.lane.b32.xlu0 %v23, 8
  %v81 = vpop.permute.xlu0 %80
  %82 = vrot.lane.b32.xlu0 %v24, 8
  %v83 = vpop.permute.xlu0 %82
  %84 = vrot.lane.b32.xlu0 %v25, 8
  %v85 = vpop.permute.xlu0 %84
  %86 = vrot.lane.b32.xlu0 %v26, 8
  %v87 = vpop.permute.xlu0 %86
  %88 = vrot.lane.b32.xlu0 %v27, 8
  %v89 = vpop.permute.xlu0 %88
  %90 = vrot.lane.b32.xlu0 %v28, 8
  %v91 = vpop.permute.xlu0 %90
  %92 = vrot.lane.b32.xlu0 %v29, 8
  %v93 = vpop.permute.xlu0 %92
  %94 = vrot.lane.b32.xlu0 %v30, 8
  %v95 = vpop.permute.xlu0 %94
  %96 = vrot.lane.b32.xlu0 %v31, 8
  %v97 = vpop.permute.xlu0 %96
  %98 = vrot.lane.b32.xlu0 %v32, 8
  %v99 = vpop.permute.xlu0 %98
  %100 = vrot.lane.b32.xlu0 %v33, 8
  %v101 = vpop.permute.xlu0 %100
  %vm119 = vcmask 130113
  %120 = vst.msk [vmem:[#allocation2 - $0x1] sm:$0xfe] %vm119, %v69
  %vm121 = vcmask 130112
  %122 = vst.msk [vmem:[#allocation2 + $0x7] sm:$0xff] %vm121, %v71
  %123 = vst.msk [vmem:[#allocation2 + $0xf] sm:$0xff] %vm121, %v73
  %124 = vst.msk [vmem:[#allocation2 + $0x17] sm:$0xff] %vm121, %v75
  %125 = vst.msk [vmem:[#allocation2 + $0x1f] sm:$0xff] %vm121, %v77
  %126 = vst.msk [vmem:[#allocation2 + $0x27] sm:$0xff] %vm121, %v79
  %127 = vst.msk [vmem:[#allocation2 + $0x2f] sm:$0xff] %vm121, %v81
  %128 = vst.msk [vmem:[#allocation2 + $0x37] sm:$0xff] %vm121, %v83
  %129 = vst.msk [vmem:[#allocation2 + $0x3f] sm:$0xff] %vm121, %v85
  %130 = vst.msk [vmem:[#allocation2 + $0x47] sm:$0xff] %vm121, %v87
  %131 = vst.msk [vmem:[#allocation2 + $0x4f] sm:$0xff] %vm121, %v89
  %132 = vst.msk [vmem:[#allocation2 + $0x57] sm:$0xff] %vm121, %v91
  %133 = vst.msk [vmem:[#allocation2 + $0x5f] sm:$0xff] %vm121, %v93
  %134 = vst.msk [vmem:[#allocation2 + $0x67] sm:$0xff] %vm121, %v95
  %135 = vst.msk [vmem:[#allocation2 + $0x6f] sm:$0xff] %vm121, %v97
  %136 = vst.msk [vmem:[#allocation2 + $0x77] sm:$0xff] %vm121, %v99
  %vm137 = vcmask 122944
  %138 = vst.msk [vmem:[#allocation2 + $0x7f] sm:$0x1] %vm137, %v101
  %139 = vrot.lane.b32.xlu0 %v17, 16
  %v140 = vpop.permute.xlu0 %139
  %141 = vrot.lane.b32.xlu0 %v18, 16
  %v142 = vpop.permute.xlu0 %141
  %143 = vrot.lane.b32.xlu0 %v19, 16
  %v144 = vpop.permute.xlu0 %143
  %145 = vrot.lane.b32.xlu0 %v20, 16
  %v146 = vpop.permute.xlu0 %145
  %147 = vrot.lane.b32.xlu0 %v21, 16
  %v148 = vpop.permute.xlu0 %147
  %149 = vrot.lane.b32.xlu0 %v22, 16
  %v150 = vpop.permute.xlu0 %149
  %151 = vrot.lane.b32.xlu0 %v23, 16
  %v152 = vpop.permute.xlu0 %151
  %153 = vrot.lane.b32.xlu0 %v24, 16
  %v154 = vpop.permute.xlu0 %153
  %155 = vrot.lane.b32.xlu0 %v25, 16
  %v156 = vpop.permute.xlu0 %155
  %157 = vrot.lane.b32.xlu0 %v26, 16
  %v158 = vpop.permute.xlu0 %157
  %159 = vrot.lane.b32.xlu0 %v27, 16
  %v160 = vpop.permute.xlu0 %159
  %161 = vrot.lane.b32.xlu0 %v28, 16
  %v162 = vpop.permute.xlu0 %161
  %163 = vrot.lane.b32.xlu0 %v29, 16
  %v164 = vpop.permute.xlu0 %163
  %165 = vrot.lane.b32.xlu0 %v30, 16
  %v166 = vpop.permute.xlu0 %165
  %167 = vrot.lane.b32.xlu0 %v31, 16
  %v168 = vpop.permute.xlu0 %167
  %169 = vrot.lane.b32.xlu0 %v32, 16
  %v170 = vpop.permute.xlu0 %169
  %171 = vrot.lane.b32.xlu0 %v33, 16
  %v172 = vpop.permute.xlu0 %171
  %vm190 = vcmask 195714
  %191 = vst.msk [vmem:[#allocation2 - $0x2] sm:$0xfc] %vm190, %v140
  %vm192 = vcmask 195712
  %193 = vst.msk [vmem:[#allocation2 + $0x6] sm:$0xff] %vm192, %v142
  %194 = vst.msk [vmem:[#allocation2 + $0xe] sm:$0xff] %vm192, %v144
  %195 = vst.msk [vmem:[#allocation2 + $0x16] sm:$0xff] %vm192, %v146
  %196 = vst.msk [vmem:[#allocation2 + $0x1e] sm:$0xff] %vm192, %v148
  %197 = vst.msk [vmem:[#allocation2 + $0x26] sm:$0xff] %vm192, %v150
  %198 = vst.msk [vmem:[#allocation2 + $0x2e] sm:$0xff] %vm192, %v152
  %199 = vst.msk [vmem:[#allocation2 + $0x36] sm:$0xff] %vm192, %v154
  %200 = vst.msk [vmem:[#allocation2 + $0x3e] sm:$0xff] %vm192, %v156
  %201 = vst.msk [vmem:[#allocation2 + $0x46] sm:$0xff] %vm192, %v158
  %202 = vst.msk [vmem:[#allocation2 + $0x4e] sm:$0xff] %vm192, %v160
  %203 = vst.msk [vmem:[#allocation2 + $0x56] sm:$0xff] %vm192, %v162
  %204 = vst.msk [vmem:[#allocation2 + $0x5e] sm:$0xff] %vm192, %v164
  %205 = vst.msk [vmem:[#allocation2 + $0x66] sm:$0xff] %vm192, %v166
  %206 = vst.msk [vmem:[#allocation2 + $0x6e] sm:$0xff] %vm192, %v168
  %207 = vst.msk [vmem:[#allocation2 + $0x76] sm:$0xff] %vm192, %v170
  %vm208 = vcmask 189568
  %209 = vst.msk [vmem:[#allocation2 + $0x7e] sm:$0x3] %vm208, %v172
  %210 = vrot.lane.b32.xlu0 %v17, 24
  %v211 = vpop.permute.xlu0 %210
  %212 = vrot.lane.b32.xlu0 %v18, 24
  %v213 = vpop.permute.xlu0 %212
  %214 = vrot.lane.b32.xlu0 %v19, 24
  %v215 = vpop.permute.xlu0 %214
  %216 = vrot.lane.b32.xlu0 %v20, 24
  %v217 = vpop.permute.xlu0 %216
  %218 = vrot.lane.b32.xlu0 %v21, 24
  %v219 = vpop.permute.xlu0 %218
  %220 = vrot.lane.b32.xlu0 %v22, 24
  %v221 = vpop.permute.xlu0 %220
  %222 = vrot.lane.b32.xlu0 %v23, 24
  %v223 = vpop.permute.xlu0 %222
  %224 = vrot.lane.b32.xlu0 %v24, 24
  %v225 = vpop.permute.xlu0 %224
  %226 = vrot.lane.b32.xlu0 %v25, 24
  %v227 = vpop.permute.xlu0 %226
  %228 = vrot.lane.b32.xlu0 %v26, 24
  %v229 = vpop.permute.xlu0 %228
  %230 = vrot.lane.b32.xlu0 %v27, 24
  %v231 = vpop.permute.xlu0 %230
  %232 = vrot.lane.b32.xlu0 %v28, 24
  %v233 = vpop.permute.xlu0 %232
  %234 = vrot.lane.b32.xlu0 %v29, 24
  %v235 = vpop.permute.xlu0 %234
  %236 = vrot.lane.b32.xlu0 %v30, 24
  %v237 = vpop.permute.xlu0 %236
  %238 = vrot.lane.b32.xlu0 %v31, 24
  %v239 = vpop.permute.xlu0 %238
  %240 = vrot.lane.b32.xlu0 %v32, 24
  %v241 = vpop.permute.xlu0 %240
  %242 = vrot.lane.b32.xlu0 %v33, 24
  %v243 = vpop.permute.xlu0 %242
  %vm261 = vcmask 261315
  %262 = vst.msk [vmem:[#allocation2 - $0x3] sm:$0xf8] %vm261, %v211
  %vm263 = vcmask 261312
  %264 = vst.msk [vmem:[#allocation2 + $0x5] sm:$0xff] %vm263, %v213
  %265 = vst.msk [vmem:[#allocation2 + $0xd] sm:$0xff] %vm263, %v215
  %266 = vst.msk [vmem:[#allocation2 + $0x15] sm:$0xff] %vm263, %v217
  %267 = vst.msk [vmem:[#allocation2 + $0x1d] sm:$0xff] %vm263, %v219
  %268 = vst.msk [vmem:[#allocation2 + $0x25] sm:$0xff] %vm263, %v221
  %269 = vst.msk [vmem:[#allocation2 + $0x2d] sm:$0xff] %vm263, %v223
  %270 = vst.msk [vmem:[#allocation2 + $0x35] sm:$0xff] %vm263, %v225
  %271 = vst.msk [vmem:[#allocation2 + $0x3d] sm:$0xff] %vm263, %v227
  %272 = vst.msk [vmem:[#allocation2 + $0x45] sm:$0xff] %vm263, %v229
  %273 = vst.msk [vmem:[#allocation2 + $0x4d] sm:$0xff] %vm263, %v231
  %274 = vst.msk [vmem:[#allocation2 + $0x55] sm:$0xff] %vm263, %v233
  %275 = vst.msk [vmem:[#allocation2 + $0x5d] sm:$0xff] %vm263, %v235
  %276 = vst.msk [vmem:[#allocation2 + $0x65] sm:$0xff] %vm263, %v237
  %277 = vst.msk [vmem:[#allocation2 + $0x6d] sm:$0xff] %vm263, %v239
  %278 = vst.msk [vmem:[#allocation2 + $0x75] sm:$0xff] %vm263, %v241
  %vm279 = vcmask 256192
  %280 = vst.msk [vmem:[#allocation2 + $0x7d] sm:$0x7] %vm279, %v243
  %v281 = vld [vmem:[#allocation2] sm:$0xff]
  %v282 = vld [vmem:[#allocation2 + $0x8] sm:$0xff]
  %v283 = vld [vmem:[#allocation2 + $0x10] sm:$0xff]
  %v284 = vld [vmem:[#allocation2 + $0x18] sm:$0xff]
  %v285 = vld [vmem:[#allocation2 + $0x20] sm:$0xff]
  %v286 = vld [vmem:[#allocation2 + $0x28] sm:$0xff]
  %v287 = vld [vmem:[#allocation2 + $0x30] sm:$0xff]
  %v288 = vld [vmem:[#allocation2 + $0x38] sm:$0xff]
  %v289 = vld [vmem:[#allocation2 + $0x40] sm:$0xff]
  %v290 = vld [vmem:[#allocation2 + $0x48] sm:$0xff]
  %v291 = vld [vmem:[#allocation2 + $0x50] sm:$0xff]
  %v292 = vld [vmem:[#allocation2 + $0x58] sm:$0xff]
  %v293 = vld [vmem:[#allocation2 + $0x60] sm:$0xff]
  %v294 = vld [vmem:[#allocation2 + $0x68] sm:$0xff]
  %v295 = vld [vmem:[#allocation2 + $0x70] sm:$0xff]
  %v296 = vld [vmem:[#allocation2 + $0x78] sm:$0xff]
  %v297 = vld [vmem:[%s1] sm:$0xff]
  %v298 = vld [vmem:[%s1 + $0x8] sm:$0xff]
  %v299 = vld [vmem:[%s1 + $0x10] sm:$0xff]
  %v300 = vld [vmem:[%s1 + $0x18] sm:$0xff]
  %vm301 = vcmask 261120
  %v303 = vsel %vm301, %v281, 0
  %v306 = vsel %vm301, %v282, 0
  %v309 = vsel %vm301, %v283, 0
  %v312 = vsel %vm301, %v284, 0
  %v315 = vsel %vm301, %v285, 0
  %v318 = vsel %vm301, %v286, 0
  %v321 = vsel %vm301, %v287, 0
  %v324 = vsel %vm301, %v288, 0
  %v327 = vsel %vm301, %v289, 0
  %v330 = vsel %vm301, %v290, 0
  %v333 = vsel %vm301, %v291, 0
  %v336 = vsel %vm301, %v292, 0
  %v339 = vsel %vm301, %v293, 0
  %v342 = vsel %vm301, %v294, 0
  %v345 = vsel %vm301, %v295, 0
  %v348 = vsel %vm301, %v296, 0
  %350 = vmatprep.subr.mxu0 0.0
  %351 = vmatpush1.msra.mxu0 %v297
  %352 = vmatprep.subr.mxu0 0.0
  %353 = vmatpush1.msra.mxu0 %v298
  %354 = vmatprep.subr.mxu0 0.0
  %355 = vmatpush1.msra.mxu0 %v299
  %356 = vmatprep.subr.mxu0 0.0
  %357 = vmatpush1.msra.mxu0 %v300
  %358 = vmatprep.subr.mxu0 0.0
  %359 = vmatpush1.msra.mxu0 0.0
  %360 = vmatprep.subr.mxu0 0.0
  %361 = vmatpush1.msra.mxu0 0.0
  %362 = vmatprep.subr.mxu0 0.0
  %363 = vmatpush1.msra.mxu0 0.0
  %364 = vmatprep.subr.mxu0 0.0
  %365 = vmatpush1.msra.mxu0 0.0
  %366 = vmatprep.subr.mxu0 0.0
  %367 = vmatpush1.msra.mxu0 0.0
  %368 = vmatprep.subr.mxu0 0.0
  %369 = vmatpush1.msra.mxu0 0.0
  %370 = vmatprep.subr.mxu0 0.0
  %371 = vmatpush1.msra.mxu0 0.0
  %372 = vmatprep.subr.mxu0 0.0
  %373 = vmatpush1.msra.mxu0 0.0
  %374 = vmatprep.subr.mxu0 0.0
  %375 = vmatpush1.msra.mxu0 0.0
  %376 = vmatprep.subr.mxu0 0.0
  %377 = vmatpush1.msra.mxu0 0.0
  %378 = vmatprep.subr.mxu0 0.0
  %379 = vmatpush1.msra.mxu0 0.0
  %380 = vmatprep.subr.mxu0 0.0
  %381 = vmatpush1.msra.mxu0 0.0
  %382 = vmatprep.subr.mxu0 0.0
  %383 = vmatpush1.msra.mxu0 0.0
  %384 = vmatprep.subr.mxu0 0.0
  %385 = vmatpush1.msra.mxu0 0.0
  %386 = vmatprep.subr.mxu0 0.0
  %387 = vmatpush1.msra.mxu0 0.0
  %388 = vmatprep.subr.mxu0 0.0
  %389 = vmatpush1.msra.mxu0 0.0
  %390 = vmatprep.subr.mxu0 0.0
  %391 = vmatpush1.msra.mxu0 0.0
  %392 = vmatprep.subr.mxu0 0.0
  %393 = vmatpush1.msra.mxu0 0.0
  %394 = vmatprep.subr.mxu0 0.0
  %395 = vmatpush1.msra.mxu0 0.0
  %396 = vmatprep.subr.mxu0 0.0
  %397 = vmatpush1.msra.mxu0 0.0
  %398 = vmatprep.subr.mxu0 0.0
  %399 = vmatpush1.msra.mxu0 0.0
  %400 = vmatprep.subr.mxu0 0.0
  %401 = vmatpush1.msra.mxu0 0.0
  %402 = vmatprep.subr.mxu0 0.0
  %403 = vmatpush1.msra.mxu0 0.0
  %404 = vmatprep.subr.mxu0 0.0
  %405 = vmatpush1.msra.mxu0 0.0
  %406 = vmatprep.subr.mxu0 0.0
  %407 = vmatpush1.msra.mxu0 0.0
  %408 = vmatprep.subr.mxu0 0.0
  %409 = vmatpush1.msra.mxu0 0.0
  %410 = vmatprep.subr.mxu0 0.0
  %411 = vmatpush1.msra.mxu0 0.0
  %412 = vmatprep.subr.mxu0 0.0
  %413 = vmatpush1.msra.mxu0 0.0
  %414 = vmatprep.mubr.f32.mxu0 0.0
  %415 = vmatmul.mubr.f32.gmra.mrb[0].mxu0 %v303
  %v416 = vpop.f32.mrb[0].mxu0
  %v417 = vadd.f32 0.0, %v416
  %v418 = vpop.f32.mrb[0].mxu0
  %419 = vmatprep.mubr.f32.mxu0 0.0
  %420 = vmatmul.mubr.f32.gmra.mrb[0].mxu0 %v306
  %v421 = vpop.f32.mrb[0].mxu0
  %v422 = vadd.f32 0.0, %v421
  %v423 = vpop.f32.mrb[0].mxu0
  %424 = vmatprep.mubr.f32.mxu0 0.0
  %425 = vmatmul.mubr.f32.gmra.mrb[0].mxu0 %v309
  %v426 = vpop.f32.mrb[0].mxu0
  %v427 = vadd.f32 0.0, %v426
  %v428 = vpop.f32.mrb[0].mxu0
  %429 = vmatprep.mubr.f32.mxu0 0.0
  %430 = vmatmul.mubr.f32.gmra.mrb[0].mxu0 %v312
  %v431 = vpop.f32.mrb[0].mxu0
  %v432 = vadd.f32 0.0, %v431
  %v433 = vpop.f32.mrb[0].mxu0
  %434 = vmatprep.mubr.f32.mxu0 0.0
  %435 = vmatmul.mubr.f32.gmra.mrb[0].mxu0 %v315
  %v436 = vpop.f32.mrb[0].mxu0
  %v437 = vadd.f32 0.0, %v436
  %v438 = vpop.f32.mrb[0].mxu0
  %439 = vmatprep.mubr.f32.mxu0 0.0
  %440 = vmatmul.mubr.f32.gmra.mrb[0].mxu0 %v318
  %v441 = vpop.f32.mrb[0].mxu0
  %v442 = vadd.f32 0.0, %v441
  %v443 = vpop.f32.mrb[0].mxu0
  %444 = vmatprep.mubr.f32.mxu0 0.0
  %445 = vmatmul.mubr.f32.gmra.mrb[0].mxu0 %v321
  %v446 = vpop.f32.mrb[0].mxu0
  %v447 = vadd.f32 0.0, %v446
  %v448 = vpop.f32.mrb[0].mxu0
  %449 = vmatprep.mubr.f32.mxu0 0.0
  %450 = vmatmul.mubr.f32.gmra.mrb[0].mxu0 %v324
  %v451 = vpop.f32.mrb[0].mxu0
  %v452 = vadd.f32 0.0, %v451
  %v453 = vpop.f32.mrb[0].mxu0
  %454 = vmatprep.mubr.f32.mxu0 0.0
  %455 = vmatmul.mubr.f32.gmra.mrb[0].mxu0 %v327
  %v456 = vpop.f32.mrb[0].mxu0
  %v457 = vadd.f32 0.0, %v456
  %v458 = vpop.f32.mrb[0].mxu0
  %459 = vmatprep.mubr.f32.mxu0 0.0
  %460 = vmatmul.mubr.f32.gmra.mrb[0].mxu0 %v330
  %v461 = vpop.f32.mrb[0].mxu0
  %v462 = vadd.f32 0.0, %v461
  %v463 = vpop.f32.mrb[0].mxu0
  %464 = vmatprep.mubr.f32.mxu0 0.0
  %465 = vmatmul.mubr.f32.gmra.mrb[0].mxu0 %v333
  %v466 = vpop.f32.mrb[0].mxu0
  %v467 = vadd.f32 0.0, %v466
  %v468 = vpop.f32.mrb[0].mxu0
  %469 = vmatprep.mubr.f32.mxu0 0.0
  %470 = vmatmul.mubr.f32.gmra.mrb[0].mxu0 %v336
  %v471 = vpop.f32.mrb[0].mxu0
  %v472 = vadd.f32 0.0, %v471
  %v473 = vpop.f32.mrb[0].mxu0
  %474 = vmatprep.mubr.f32.mxu0 0.0
  %475 = vmatmul.mubr.f32.gmra.mrb[0].mxu0 %v339
  %v476 = vpop.f32.mrb[0].mxu0
  %v477 = vadd.f32 0.0, %v476
  %v478 = vpop.f32.mrb[0].mxu0
  %479 = vmatprep.mubr.f32.mxu0 0.0
  %480 = vmatmul.mubr.f32.gmra.mrb[0].mxu0 %v342
  %v481 = vpop.f32.mrb[0].mxu0
  %v482 = vadd.f32 0.0, %v481
  %v483 = vpop.f32.mrb[0].mxu0
  %484 = vmatprep.mubr.f32.mxu0 0.0
  %485 = vmatmul.mubr.f32.gmra.mrb[0].mxu0 %v345
  %v486 = vpop.f32.mrb[0].mxu0
  %v487 = vadd.f32 0.0, %v486
  %v488 = vpop.f32.mrb[0].mxu0
  %489 = vmatprep.mubr.f32.mxu0 0.0
  %490 = vmatmul.mubr.f32.gmra.mrb[0].mxu0 %v348
  %v491 = vpop.f32.mrb[0].mxu0
  %v492 = vadd.f32 0.0, %v491
  %v493 = vpop.f32.mrb[0].mxu0
  %494 = vdwg.mxu0
  %v495 = vld [vmem:[%s1 + $0x20] sm:$0xff]
  %v496 = vld [vmem:[%s1 + $0x28] sm:$0xff]
  %v497 = vadd.f32 %v417, %v495
  %v498 = vadd.f32 %v422, %v496
  %v499 = vadd.f32 %v427, %v495
  %v500 = vadd.f32 %v432, %v496
  %v501 = vadd.f32 %v437, %v495
  %v502 = vadd.f32 %v442, %v496
  %v503 = vadd.f32 %v447, %v495
  %v504 = vadd.f32 %v452, %v496
  %v505 = vadd.f32 %v457, %v495
  %v506 = vadd.f32 %v462, %v496
  %v507 = vadd.f32 %v467, %v495
  %v508 = vadd.f32 %v472, %v496
  %v509 = vadd.f32 %v477, %v495
  %v510 = vadd.f32 %v482, %v496
  %v511 = vadd.f32 %v487, %v495
  %v512 = vadd.f32 %v492, %v496
  %vm513 = vcmask 392192
  %v514 = vsel %vm513, %v497, -inf
  %v515 = vsel %vm513, %v498, -inf
  %v516 = vmax.f32 %v514, %v515
  %v517 = vrot.slane %v516, 4
  %v518 = vmax.f32 %v516, %v517
  %v519 = vrot.slane %v518, 2
  %v520 = vmax.f32 %v518, %v519
  %v521 = vrot.slane %v520, 1
  %v522 = vmax.f32 %v520, %v521
  %v523 = vsel %vm513, %v499, -inf
  %v524 = vsel %vm513, %v500, -inf
  %v525 = vmax.f32 %v523, %v524
  %v526 = vrot.slane %v525, 4
  %v527 = vmax.f32 %v525, %v526
  %v528 = vrot.slane %v527, 2
  %v529 = vmax.f32 %v527, %v528
  %v530 = vrot.slane %v529, 1
  %v531 = vmax.f32 %v529, %v530
  %v532 = vsel %vm513, %v501, -inf
  %v533 = vsel %vm513, %v502, -inf
  %v534 = vmax.f32 %v532, %v533
  %v535 = vrot.slane %v534, 4
  %v536 = vmax.f32 %v534, %v535
  %v537 = vrot.slane %v536, 2
  %v538 = vmax.f32 %v536, %v537
  %v539 = vrot.slane %v538, 1
  %v540 = vmax.f32 %v538, %v539
  %v541 = vsel %vm513, %v503, -inf
  %v542 = vsel %vm513, %v504, -inf
  %v543 = vmax.f32 %v541, %v542
  %v544 = vrot.slane %v543, 4
  %v545 = vmax.f32 %v543, %v544
  %v546 = vrot.slane %v545, 2
  %v547 = vmax.f32 %v545, %v546
  %v548 = vrot.slane %v547, 1
  %v549 = vmax.f32 %v547, %v548
  %v550 = vsel %vm513, %v505, -inf
  %v551 = vsel %vm513, %v506, -inf
  %v552 = vmax.f32 %v550, %v551
  %v553 = vrot.slane %v552, 4
  %v554 = vmax.f32 %v552, %v553
  %v555 = vrot.slane %v554, 2
  %v556 = vmax.f32 %v554, %v555
  %v557 = vrot.slane %v556, 1
  %v558 = vmax.f32 %v556, %v557
  %v559 = vsel %vm513, %v507, -inf
  %v560 = vsel %vm513, %v508, -inf
  %v561 = vmax.f32 %v559, %v560
  %v562 = vrot.slane %v561, 4
  %v563 = vmax.f32 %v561, %v562
  %v564 = vrot.slane %v563, 2
  %v565 = vmax.f32 %v563, %v564
  %v566 = vrot.slane %v565, 1
  %v567 = vmax.f32 %v565, %v566
  %v568 = vsel %vm513, %v509, -inf
  %v569 = vsel %vm513, %v510, -inf
  %v570 = vmax.f32 %v568, %v569
  %v571 = vrot.slane %v570, 4
  %v572 = vmax.f32 %v570, %v571
  %v573 = vrot.slane %v572, 2
  %v574 = vmax.f32 %v572, %v573
  %v575 = vrot.slane %v574, 1
  %v576 = vmax.f32 %v574, %v575
  %v577 = vsel %vm513, %v511, -inf
  %v578 = vsel %vm513, %v512, -inf
  %v579 = vmax.f32 %v577, %v578
  %v580 = vrot.slane %v579, 4
  %v581 = vmax.f32 %v579, %v580
  %v582 = vrot.slane %v581, 2
  %v583 = vmax.f32 %v581, %v582
  %v584 = vrot.slane %v583, 1
  %v585 = vmax.f32 %v583, %v584
  %v586 = vld [vmem:[%s2] sm:$0xff]
  %v587 = vld [vmem:[%s2 + $0x8] sm:$0xff]
  %v588 = vld [vmem:[%s2 + $0x10] sm:$0xff]
  %v589 = vld [vmem:[%s2 + $0x18] sm:$0xff]
  %v590 = vld [vmem:[%s2 + $0x20] sm:$0xff]
  %v591 = vld [vmem:[%s2 + $0x28] sm:$0xff]
  %v592 = vld [vmem:[%s2 + $0x30] sm:$0x1]
  %v593 = vlaneseq
  %v594 = vshrl.u32 %v593, 7
  %v595 = vsub.s32 0, %v594
  %v596 = vrot.slane %v592, %v595
  %vm605 = vcmask 1041409
  %v606 = vsel %vm605, %v531, %v522
  %vm607 = vcmask 1042434
  %v608 = vsel %vm607, %v540, %v606
  %vm609 = vcmask 1043459
  %v610 = vsel %vm609, %v549, %v608
  %vm611 = vcmask 1044484
  %v612 = vsel %vm611, %v558, %v610
  %vm613 = vcmask 1045509
  %v614 = vsel %vm613, %v567, %v612
  %vm615 = vcmask 1046534
  %v616 = vsel %vm615, %v576, %v614
  %vm617 = vcmask 1047559
  %v618 = vsel %vm617, %v585, %v616
  %v619 = vsel %vm513, %v618, 0
  %621 = vmatprep.subr.mxu0 0.0
  %622 = vmatpush1.msra.mxu0 %v586
  %623 = vmatprep.subr.mxu0 0.0
  %624 = vmatpush1.msra.mxu0 %v587
  %625 = vmatprep.subr.mxu0 0.0
  %626 = vmatpush1.msra.mxu0 %v588
  %627 = vmatprep.subr.mxu0 0.0
  %628 = vmatpush1.msra.mxu0 %v589
  %629 = vmatprep.subr.mxu0 0.0
  %630 = vmatpush1.msra.mxu0 %v590
  %631 = vmatprep.subr.mxu0 0.0
  %632 = vmatpush1.msra.mxu0 %v591
  %633 = vmatprep.subr.mxu0 0.0
  %634 = vmatpush1.msra.mxu0 0.0
  %635 = vmatprep.subr.mxu0 0.0
  %636 = vmatpush1.msra.mxu0 0.0
  %637 = vmatprep.subr.mxu0 0.0
  %638 = vmatpush1.msra.mxu0 0.0
  %639 = vmatprep.subr.mxu0 0.0
  %640 = vmatpush1.msra.mxu0 0.0
  %641 = vmatprep.subr.mxu0 0.0
  %642 = vmatpush1.msra.mxu0 0.0
  %643 = vmatprep.subr.mxu0 0.0
  %644 = vmatpush1.msra.mxu0 0.0
  %645 = vmatprep.subr.mxu0 0.0
  %646 = vmatpush1.msra.mxu0 0.0
  %647 = vmatprep.subr.mxu0 0.0
  %648 = vmatpush1.msra.mxu0 0.0
  %649 = vmatprep.subr.mxu0 0.0
  %650 = vmatpush1.msra.mxu0 0.0
  %651 = vmatprep.subr.mxu0 0.0
  %652 = vmatpush1.msra.mxu0 0.0
  %653 = vmatprep.subr.mxu0 0.0
  %654 = vmatpush1.msra.mxu0 0.0
  %655 = vmatprep.subr.mxu0 0.0
  %656 = vmatpush1.msra.mxu0 0.0
  %657 = vmatprep.subr.mxu0 0.0
  %658 = vmatpush1.msra.mxu0 0.0
  %659 = vmatprep.subr.mxu0 0.0
  %660 = vmatpush1.msra.mxu0 0.0
  %661 = vmatprep.subr.mxu0 0.0
  %662 = vmatpush1.msra.mxu0 0.0
  %663 = vmatprep.subr.mxu0 0.0
  %664 = vmatpush1.msra.mxu0 0.0
  %665 = vmatprep.subr.mxu0 0.0
  %666 = vmatpush1.msra.mxu0 0.0
  %667 = vmatprep.subr.mxu0 0.0
  %668 = vmatpush1.msra.mxu0 0.0
  %669 = vmatprep.subr.mxu0 0.0
  %670 = vmatpush1.msra.mxu0 0.0
  %671 = vmatprep.subr.mxu0 0.0
  %672 = vmatpush1.msra.mxu0 0.0
  %673 = vmatprep.subr.mxu0 0.0
  %674 = vmatpush1.msra.mxu0 0.0
  %675 = vmatprep.subr.mxu0 0.0
  %676 = vmatpush1.msra.mxu0 0.0
  %677 = vmatprep.subr.mxu0 0.0
  %678 = vmatpush1.msra.mxu0 0.0
  %679 = vmatprep.subr.mxu0 0.0
  %680 = vmatpush1.msra.mxu0 0.0
  %681 = vmatprep.subr.mxu0 0.0
  %682 = vmatpush1.msra.mxu0 0.0
  %683 = vmatprep.subr.mxu0 0.0
  %684 = vmatpush1.msra.mxu0 0.0
  %685 = vmatprep.mubr.f32.mxu0 0.0
  %686 = vmatmul.mubr.f32.gmra.mrb[0].mxu0 %v619
  %v687 = vpop.f32.mrb[0].mxu0
  %v688 = vadd.f32 %v596, %v687
  %v689 = vpop.f32.mrb[0].mxu0
  %690 = vdwg.mxu0
  %v691 = vmax.f32 %v688, 0.0
  %v692 = vld [vmem:[%s2 + $0x38] sm:$0xff]
  %v693 = vld [vmem:[%s2 + $0x40] sm:$0xff]
  %v694 = vld [vmem:[%s2 + $0x48] sm:$0xff]
  %v695 = vld [vmem:[%s2 + $0x50] sm:$0xff]
  %v696 = vld [vmem:[%s2 + $0x58] sm:$0x1]
  %v697 = vlaneseq
  %v698 = vshrl.u32 %v697, 7
  %v699 = vsub.s32 0, %v698
  %v700 = vrot.slane %v696, %v699
  %v702 = vsel %vm301, %v691, 0
  %704 = vmatprep.subr.mxu0 0.0
  %705 = vmatpush1.msra.mxu0 %v692
  %706 = vmatprep.subr.mxu0 0.0
  %707 = vmatpush1.msra.mxu0 %v693
  %708 = vmatprep.subr.mxu0 0.0
  %709 = vmatpush1.msra.mxu0 %v694
  %710 = vmatprep.subr.mxu0 0.0
  %711 = vmatpush1.msra.mxu0 %v695
  %712 = vmatprep.subr.mxu0 0.0
  %713 = vmatpush1.msra.mxu0 0.0
  %714 = vmatprep.subr.mxu0 0.0
  %715 = vmatpush1.msra.mxu0 0.0
  %716 = vmatprep.subr.mxu0 0.0
  %717 = vmatpush1.msra.mxu0 0.0
  %718 = vmatprep.subr.mxu0 0.0
  %719 = vmatpush1.msra.mxu0 0.0
  %720 = vmatprep.subr.mxu0 0.0
  %721 = vmatpush1.msra.mxu0 0.0
  %722 = vmatprep.subr.mxu0 0.0
  %723 = vmatpush1.msra.mxu0 0.0
  %724 = vmatprep.subr.mxu0 0.0
  %725 = vmatpush1.msra.mxu0 0.0
  %726 = vmatprep.subr.mxu0 0.0
  %727 = vmatpush1.msra.mxu0 0.0
  %728 = vmatprep.subr.mxu0 0.0
  %729 = vmatpush1.msra.mxu0 0.0
  %730 = vmatprep.subr.mxu0 0.0
  %731 = vmatpush1.msra.mxu0 0.0
  %732 = vmatprep.subr.mxu0 0.0
  %733 = vmatpush1.msra.mxu0 0.0
  %734 = vmatprep.subr.mxu0 0.0
  %735 = vmatpush1.msra.mxu0 0.0
  %736 = vmatprep.subr.mxu0 0.0
  %737 = vmatpush1.msra.mxu0 0.0
  %738 = vmatprep.subr.mxu0 0.0
  %739 = vmatpush1.msra.mxu0 0.0
  %740 = vmatprep.subr.mxu0 0.0
  %741 = vmatpush1.msra.mxu0 0.0
  %742 = vmatprep.subr.mxu0 0.0
  %743 = vmatpush1.msra.mxu0 0.0
  %744 = vmatprep.subr.mxu0 0.0
  %745 = vmatpush1.msra.mxu0 0.0
  %746 = vmatprep.subr.mxu0 0.0
  %747 = vmatpush1.msra.mxu0 0.0
  %748 = vmatprep.subr.mxu0 0.0
  %749 = vmatpush1.msra.mxu0 0.0
  %750 = vmatprep.subr.mxu0 0.0
  %751 = vmatpush1.msra.mxu0 0.0
  %752 = vmatprep.subr.mxu0 0.0
  %753 = vmatpush1.msra.mxu0 0.0
  %754 = vmatprep.subr.mxu0 0.0
  %755 = vmatpush1.msra.mxu0 0.0
  %756 = vmatprep.subr.mxu0 0.0
  %757 = vmatpush1.msra.mxu0 0.0
  %758 = vmatprep.subr.mxu0 0.0
  %759 = vmatpush1.msra.mxu0 0.0
  %760 = vmatprep.subr.mxu0 0.0
  %761 = vmatpush1.msra.mxu0 0.0
  %762 = vmatprep.subr.mxu0 0.0
  %763 = vmatpush1.msra.mxu0 0.0
  %764 = vmatprep.subr.mxu0 0.0
  %765 = vmatpush1.msra.mxu0 0.0
  %766 = vmatprep.subr.mxu0 0.0
  %767 = vmatpush1.msra.mxu0 0.0
  %768 = vmatprep.mubr.f32.mxu0 0.0
  %769 = vmatmul.mubr.f32.gmra.mrb[0].mxu0 %v702
  %v770 = vpop.f32.mrb[0].mxu0
  %v771 = vadd.f32 %v700, %v770
  %v772 = vpop.f32.mrb[0].mxu0
  %773 = vdwg.mxu0
  %v774 = vmax.f32 %v771, 0.0
  %v775 = vld [vmem:[%s2 + $0x60] sm:$0xff]
  %v776 = vld [vmem:[%s2 + $0x68] sm:$0xff]
  %v777 = vld [vmem:[%s2 + $0x70] sm:$0xff]
  %v778 = vld [vmem:[%s2 + $0x78] sm:$0xff]
  %v779 = vld [vmem:[%s2 + $0x80] sm:$0x1]
  %v780 = vlaneseq
  %v781 = vshrl.u32 %v780, 7
  %v782 = vsub.s32 0, %v781
  %v783 = vrot.slane %v779, %v782
  %v785 = vsel %vm301, %v774, 0
  %787 = vmatprep.subr.mxu0 0.0
  %788 = vmatpush1.msra.mxu0 %v775
  %789 = vmatprep.subr.mxu0 0.0
  %790 = vmatpush1.msra.mxu0 %v776
  %791 = vmatprep.subr.mxu0 0.0
  %792 = vmatpush1.msra.mxu0 %v777
  %793 = vmatprep.subr.mxu0 0.0
  %794 = vmatpush1.msra.mxu0 %v778
  %795 = vmatprep.subr.mxu0 0.0
  %796 = vmatpush1.msra.mxu0 0.0
  %797 = vmatprep.subr.mxu0 0.0
  %798 = vmatpush1.msra.mxu0 0.0
  %799 = vmatprep.subr.mxu0 0.0
  %800 = vmatpush1.msra.mxu0 0.0
  %801 = vmatprep.subr.mxu0 0.0
  %802 = vmatpush1.msra.mxu0 0.0
  %803 = vmatprep.subr.mxu0 0.0
  %804 = vmatpush1.msra.mxu0 0.0
  %805 = vmatprep.subr.mxu0 0.0
  %806 = vmatpush1.msra.mxu0 0.0
  %807 = vmatprep.subr.mxu0 0.0
  %808 = vmatpush1.msra.mxu0 0.0
  %809 = vmatprep.subr.mxu0 0.0
  %810 = vmatpush1.msra.mxu0 0.0
  %811 = vmatprep.subr.mxu0 0.0
  %812 = vmatpush1.msra.mxu0 0.0
  %813 = vmatprep.subr.mxu0 0.0
  %814 = vmatpush1.msra.mxu0 0.0
  %815 = vmatprep.subr.mxu0 0.0
  %816 = vmatpush1.msra.mxu0 0.0
  %817 = vmatprep.subr.mxu0 0.0
  %818 = vmatpush1.msra.mxu0 0.0
  %819 = vmatprep.subr.mxu0 0.0
  %820 = vmatpush1.msra.mxu0 0.0
  %821 = vmatprep.subr.mxu0 0.0
  %822 = vmatpush1.msra.mxu0 0.0
  %823 = vmatprep.subr.mxu0 0.0
  %824 = vmatpush1.msra.mxu0 0.0
  %825 = vmatprep.subr.mxu0 0.0
  %826 = vmatpush1.msra.mxu0 0.0
  %827 = vmatprep.subr.mxu0 0.0
  %828 = vmatpush1.msra.mxu0 0.0
  %829 = vmatprep.subr.mxu0 0.0
  %830 = vmatpush1.msra.mxu0 0.0
  %831 = vmatprep.subr.mxu0 0.0
  %832 = vmatpush1.msra.mxu0 0.0
  %833 = vmatprep.subr.mxu0 0.0
  %834 = vmatpush1.msra.mxu0 0.0
  %835 = vmatprep.subr.mxu0 0.0
  %836 = vmatpush1.msra.mxu0 0.0
  %837 = vmatprep.subr.mxu0 0.0
  %838 = vmatpush1.msra.mxu0 0.0
  %839 = vmatprep.subr.mxu0 0.0
  %840 = vmatpush1.msra.mxu0 0.0
  %841 = vmatprep.subr.mxu0 0.0
  %842 = vmatpush1.msra.mxu0 0.0
  %843 = vmatprep.subr.mxu0 0.0
  %844 = vmatpush1.msra.mxu0 0.0
  %845 = vmatprep.subr.mxu0 0.0
  %846 = vmatpush1.msra.mxu0 0.0
  %847 = vmatprep.subr.mxu0 0.0
  %848 = vmatpush1.msra.mxu0 0.0
  %849 = vmatprep.subr.mxu0 0.0
  %850 = vmatpush1.msra.mxu0 0.0
  %851 = vmatprep.mubr.f32.mxu0 0.0
  %852 = vmatmul.mubr.f32.gmra.mrb[0].mxu0 %v785
  %v853 = vpop.f32.mrb[0].mxu0
  %v854 = vadd.f32 %v783, %v853
  %v855 = vpop.f32.mrb[0].mxu0
  %856 = vdwg.mxu0
  %v857 = vmax.f32 %v854, 0.0
  %v858 = vld [vmem:[%s3] sm:$0xff]
  %v859 = vld [vmem:[%s3 + $0x8] sm:$0xff]
  %v860 = vld [vmem:[%s3 + $0x10] sm:$0xff]
  %v861 = vld [vmem:[%s3 + $0x18] sm:$0xff]
  %v862 = vld [vmem:[%s3 + $0x20] sm:$0x1]
  %v863 = vlaneseq
  %v864 = vshrl.u32 %v863, 7
  %v865 = vsub.s32 0, %v864
  %v866 = vrot.slane %v862, %v865
  %v868 = vsel %vm301, %v857, 0
  %870 = vmatprep.subr.mxu0 0.0
  %871 = vmatpush1.msra.mxu0 %v858
  %872 = vmatprep.subr.mxu0 0.0
  %873 = vmatpush1.msra.mxu0 %v859
  %874 = vmatprep.subr.mxu0 0.0
  %875 = vmatpush1.msra.mxu0 %v860
  %876 = vmatprep.subr.mxu0 0.0
  %877 = vmatpush1.msra.mxu0 %v861
  %878 = vmatprep.subr.mxu0 0.0
  %879 = vmatpush1.msra.mxu0 0.0
  %880 = vmatprep.subr.mxu0 0.0
  %881 = vmatpush1.msra.mxu0 0.0
  %882 = vmatprep.subr.mxu0 0.0
  %883 = vmatpush1.msra.mxu0 0.0
  %884 = vmatprep.subr.mxu0 0.0
  %885 = vmatpush1.msra.mxu0 0.0
  %886 = vmatprep.subr.mxu0 0.0
  %887 = vmatpush1.msra.mxu0 0.0
  %888 = vmatprep.subr.mxu0 0.0
  %889 = vmatpush1.msra.mxu0 0.0
  %890 = vmatprep.subr.mxu0 0.0
  %891 = vmatpush1.msra.mxu0 0.0
  %892 = vmatprep.subr.mxu0 0.0
  %893 = vmatpush1.msra.mxu0 0.0
  %894 = vmatprep.subr.mxu0 0.0
  %895 = vmatpush1.msra.mxu0 0.0
  %896 = vmatprep.subr.mxu0 0.0
  %897 = vmatpush1.msra.mxu0 0.0
  %898 = vmatprep.subr.mxu0 0.0
  %899 = vmatpush1.msra.mxu0 0.0
  %900 = vmatprep.subr.mxu0 0.0
  %901 = vmatpush1.msra.mxu0 0.0
  %902 = vmatprep.subr.mxu0 0.0
  %903 = vmatpush1.msra.mxu0 0.0
  %904 = vmatprep.subr.mxu0 0.0
  %905 = vmatpush1.msra.mxu0 0.0
  %906 = vmatprep.subr.mxu0 0.0
  %907 = vmatpush1.msra.mxu0 0.0
  %908 = vmatprep.subr.mxu0 0.0
  %909 = vmatpush1.msra.mxu0 0.0
  %910 = vmatprep.subr.mxu0 0.0
  %911 = vmatpush1.msra.mxu0 0.0
  %912 = vmatprep.subr.mxu0 0.0
  %913 = vmatpush1.msra.mxu0 0.0
  %914 = vmatprep.subr.mxu0 0.0
  %915 = vmatpush1.msra.mxu0 0.0
  %916 = vmatprep.subr.mxu0 0.0
  %917 = vmatpush1.msra.mxu0 0.0
  %918 = vmatprep.subr.mxu0 0.0
  %919 = vmatpush1.msra.mxu0 0.0
  %920 = vmatprep.subr.mxu0 0.0
  %921 = vmatpush1.msra.mxu0 0.0
  %922 = vmatprep.subr.mxu0 0.0
  %923 = vmatpush1.msra.mxu0 0.0
  %924 = vmatprep.subr.mxu0 0.0
  %925 = vmatpush1.msra.mxu0 0.0
  %926 = vmatprep.subr.mxu0 0.0
  %927 = vmatpush1.msra.mxu0 0.0
  %928 = vmatprep.subr.mxu0 0.0
  %929 = vmatpush1.msra.mxu0 0.0
  %930 = vmatprep.subr.mxu0 0.0
  %931 = vmatpush1.msra.mxu0 0.0
  %932 = vmatprep.subr.mxu0 0.0
  %933 = vmatpush1.msra.mxu0 0.0
  %934 = vmatprep.mubr.f32.mxu0 0.0
  %935 = vmatmul.mubr.f32.gmra.mrb[0].mxu0 %v868
  %v936 = vpop.f32.mrb[0].mxu0
  %v937 = vadd.f32 %v866, %v936
  %v938 = vpop.f32.mrb[0].mxu0
  %939 = vdwg.mxu0
  %v940 = vxor.u32 %v937, 2147483648
  %v941 = vmul.f32 %v940, 1.442695
  %v942 = vpow.pop %v941
  %v943 = vadd.f32 %v942, 1.0
  %v944 = vrcp.pop %v943
  %v945 = vmul.f32 1.0, %v944
  %946 = vst [vmem:[%s4] sm:$0xff] %v945
  // Predicated region
  $region18: #{deep_ec_cnn_forward.1} parent=0 // pred_check
    _
  $region19: #{deep_ec_cnn_forward.1} parent=0 // pred_check_branch
    %948 = sbr.rel (0) target = $region21
  $region20: #{deep_ec_cnn_forward.1} parent=0 // pred_region
    _
  $region21: #{deep_ec_cnn_forward.1} parent=0 // pred_fallthru
    _
  // Predicated region
  $region22: #{deep_ec_cnn_forward.1} parent=0 // pred_check
    _
  $region23: #{deep_ec_cnn_forward.1} parent=0 // pred_check_branch
    %950 = sbr.rel (0) target = $region25
  $region24: #{deep_ec_cnn_forward.1} parent=0 // pred_region
    _
  $region25: #{deep_ec_cnn_forward.1} parent=0 // pred_fallthru
    _

</llo_original>
